<compile_context>
chip_gen: v7x
topology: tpu7x:2x2x1
jax: 0.10.0
libtpu: 0.0.40
codegen_flags: <defaults>
</compile_context>

<pallas_src>
import jax
import jax.numpy as jnp
import numpy as np
from jax.experimental import pallas as pl
from jax.experimental.pallas import tpu as pltpu

_LANES = 128


# ---------------------------------------------------------------------------
# Generation-tuned copy parameters (picked once at import time).
# ---------------------------------------------------------------------------
def _select_copy_params():
    """Pick (target_tile_rows, vmem_limit_bytes) for the tiled copy path."""
    # Conservative defaults legal on every generation:
    #   8192 rows x 128 lanes x 4 B = 4 MiB tiles; double-buffered in + out
    #   = 16 MiB, under a 32 MiB scoped limit (fits v5e/v6e/v7x physical VMEM).
    target_rows, vmem_limit = 8192, 32 * 1024 * 1024
    try:
        vmem_cap = pltpu.get_tpu_info().vmem_capacity_bytes
        if vmem_cap <= 80 * 1024 * 1024:
            # v7x-class (64 MiB VMEM/TC, ~3.2 TB/s HBM): 8 MiB tiles drop the
            # ~0.35us per-grid-step overhead below 10%; 44 MiB scoped still
            # leaves headroom under the 64 MiB physical VMEM.
            target_rows, vmem_limit = 16384, 44 * 1024 * 1024
        # v5e/v6e-class (128 MiB physical) keep the 4 MiB / 32 MiB defaults
        # (exact v5e recommendation; within the v6e sweet spot).
    except Exception:
        pass  # keep conservative defaults if the hardware query is unavailable
    return target_rows, vmem_limit


_TARGET_TILE_ROWS, _VMEM_LIMIT_BYTES = _select_copy_params()


# ---------------------------------------------------------------------------
# Path 1: zero-copy identity (output aliases the input HBM buffer).
# ---------------------------------------------------------------------------
def _alias_identity_kernel(x_hbm_ref, o_hbm_ref):
    del x_hbm_ref
    # Output aliases the input buffer; nothing to move.  `touch` adds a fake
    # read+write dependency so the otherwise-empty kernel stays live.
    pltpu.touch(o_hbm_ref)


def _identity_aliased(x: jax.Array) -> jax.Array:
    return pl.pallas_call(
        _alias_identity_kernel,
        out_shape=jax.ShapeDtypeStruct(x.shape, x.dtype),
        in_specs=[pl.BlockSpec(memory_space=pl.ANY)],   # raw HBM ref, no auto-DMA
        out_specs=pl.BlockSpec(memory_space=pl.ANY),
        input_output_aliases={0: 0},                    # output IS the input buffer
        compiler_params=pltpu.CompilerParams(has_side_effects=True),
    )(x)


def _probe_aliased_identity() -> bool:
    """Static (import-time) probe: does the aliased no-op compile here?

    Runs once, outside any jit trace, so the fallback decision is static and a
    lowering failure cannot surface as a hard compile error at call time.
    """
    try:
        jax.jit(_identity_aliased, donate_argnums=0).lower(
            jax.ShapeDtypeStruct((8, _LANES), jnp.float32)
        ).compile()
        return True
    except Exception:
        return False


_ALIAS_SUPPORTED = _probe_aliased_identity()


# ---------------------------------------------------------------------------
# Path 2: lane-dense tiled copy at the HBM roofline.
# ---------------------------------------------------------------------------
def _copy_kernel(x_ref, o_ref):
    o_ref[...] = x_ref[...]


def _round_up(v: int, m: int) -> int:
    return ((v + m - 1) // m) * m


def _choose_tile_rows(rows: int) -> int:
    if rows <= 64:
        # Tiny input: one full-array block (always tile-legal for any dtype).
        return rows
    # Prefer >= 2 tiles so the 'parallel' grid can shard across v7x's two
    # TensorCores; round to 32 sublanes so the block spec is legal for every
    # element width (32 covers the (8,128)/(16,128)/(32,128) minimums).
    return min(_TARGET_TILE_ROWS, _round_up(pl.cdiv(rows, 2), 32))


def _tiled_copy_2d(slab: jax.Array) -> jax.Array:
    """Copy a lane-dense (rows, 128) slab with a large-tile 'parallel' grid."""
    rows = slab.shape[0]
    tile_rows = _choose_tile_rows(rows)
    grid = (pl.cdiv(rows, tile_rows),)       # ragged last block is masked
    return pl.pallas_call(
        _copy_kernel,
        out_shape=jax.ShapeDtypeStruct(slab.shape, slab.dtype),
        grid=grid,
        in_specs=[pl.BlockSpec((tile_rows, _LANES), lambda i: (i, 0))],
        out_specs=pl.BlockSpec((tile_rows, _LANES), lambda i: (i, 0)),
        compiler_params=pltpu.CompilerParams(
            dimension_semantics=("parallel",),           # megacore-shardable
            vmem_limit_bytes=_VMEM_LIMIT_BYTES),
    )(slab)


def _copy_flat(flat: jax.Array) -> jax.Array:
    """Copy a 1-D array through the lane-dense tiled kernel."""
    n = flat.shape[0]
    rem = n % _LANES
    if rem == 0:
        return _tiled_copy_2d(flat.reshape(n // _LANES, _LANES)).reshape(n)
    # Ragged lane count: pad to a lane multiple, copy, slice back.  This keeps
    # every Pallas block tile-legal and avoids staging the whole array as a
    # single VMEM block (which would VMEM-OOM for large tensors).
    padded = jnp.pad(flat, (0, _LANES - rem))
    out = _tiled_copy_2d(padded.reshape(-1, _LANES)).reshape(-1)
    return out[:n]


def _identity_copy(x: jax.Array) -> jax.Array:
    if x.size == 0:
        return x
    itemsize = jnp.dtype(x.dtype).itemsize
    # Sub-32-bit dtypes (bf16 / int8 / fp8 ...): reinterpret as dense uint32
    # words so rows shrink and every tile / store stays fully dense and legal.
    if itemsize < 4 and x.dtype != jnp.bool_ and (x.size * itemsize) % 4 == 0:
        ratio = 4 // itemsize
        words = jax.lax.bitcast_convert_type(x.reshape(-1, ratio), jnp.uint32)
        out_words = _copy_flat(words)
        return jax.lax.bitcast_convert_type(out_words, x.dtype).reshape(x.shape)
    return _copy_flat(x.reshape(-1)).reshape(x.shape)


# ---------------------------------------------------------------------------
# Public entry point.
# ---------------------------------------------------------------------------
def segmenter_forward(x: jax.Array, *, donate_input: bool = False) -> jax.Array:
    """Pallas implementation of SegmenterModel.forward (identity).

    Pass donate_input=True ONLY when the caller donates `x` at its jit
    boundary (jax.jit(..., donate_argnums=...)); only then is the aliased path
    truly zero-traffic.  Non-donatable calls take the tuned roofline copy
    instead of relying on XLA's hidden defensive copy.
    """
    if donate_input and _ALIAS_SUPPORTED:
        return _identity_aliased(x)
    return _identity_copy(x)


if __name__ == "__main__":
    key = jax.random.PRNGKey(0)

    # SegmenterModel(in_size=3) implies 3-channel NCHW image inputs.
    x = jax.random.normal(key, (2, 3, 16, 16), dtype=jnp.float32)
    x_host = np.asarray(x)

    # --- Copy path (caller keeps its buffer), under jit ---------------------
    y = jax.block_until_ready(jax.jit(segmenter_forward)(x))
    assert y.shape == x_host.shape and y.dtype == x_host.dtype
    assert np.array_equal(np.asarray(y), x_host)

    # --- Zero-copy aliased path (input donated at the jit boundary) ---------
    if _ALIAS_SUPPORTED:
        fwd_donated = jax.jit(lambda a: segmenter_forward(a, donate_input=True),
                              donate_argnums=0)
        x_don = jnp.asarray(x_host)          # fresh device buffer to donate
        y_alias = jax.block_until_ready(fwd_donated(x_don))
        del x_don                            # donated: must not be reused
        assert y_alias.shape == x_host.shape and y_alias.dtype == x_host.dtype
        assert np.array_equal(np.asarray(y_alias), x_host)

    # --- Multi-tile 'parallel' grid (exercises the tiled roofline path) -----
    xb = jax.random.normal(key, (4, 3, 64, 128), dtype=jnp.float32)
    yb = jax.block_until_ready(segmenter_forward(xb))
    assert np.array_equal(np.asarray(yb), np.asarray(xb))

    # --- Sub-32-bit dtype (uint32 word path) ---------------------------------
    xh = jax.random.normal(key, (2, 3, 16, 16), dtype=jnp.bfloat16)
    yh = jax.block_until_ready(segmenter_forward(xh))
    assert np.array_equal(np.asarray(yh), np.asarray(xh))

    # --- Ragged element count (lane-pad path) --------------------------------
    xr = jax.random.normal(key, (3, 5, 7), dtype=jnp.float32)
    yr = jax.block_until_ready(segmenter_forward(xr))
    assert np.array_equal(np.asarray(yr), np.asarray(xr))

    print("KERNEL_OK")
</pallas_src>

<mosaic_0001>
module attributes {stable_mosaic.version = 11 : i64} {
  func.func @_copy_kernel(%arg0: i32, %arg1: memref<12x128xf32, #tpu.memory_space<vmem>>, %arg2: memref<12x128xf32, #tpu.memory_space<vmem>>) attributes {dimension_semantics = [#tpu.dimension_semantics<parallel>], iteration_bounds = array<i64: 1>, scalar_prefetch = 0 : i64, scratch_operands = 0 : i64, tpu.core_type = #tpu.core_type<tc>, window_params = [{transform_indices = @transform_0, window_bounds = array<i64: 12, 128>}, {transform_indices = @transform_1, window_bounds = array<i64: 12, 128>}]} {
    %c0 = arith.constant 0 : index
    %c0_0 = arith.constant 0 : index
    %0 = vector.load %arg1[%c0, %c0_0] : memref<12x128xf32, #tpu.memory_space<vmem>>, vector<12x128xf32>
    %c0_1 = arith.constant 0 : index
    %c0_2 = arith.constant 0 : index
    %1 = vector.load %arg2[%c0_1, %c0_2] : memref<12x128xf32, #tpu.memory_space<vmem>>, vector<12x128xf32>
    tpu.vector_store %arg2[%c0_1, %c0_2], %0 {strides = array<i32>} : memref<12x128xf32, #tpu.memory_space<vmem>>, vector<12x128xf32>,
    return
  }
  func.func @transform_0(%arg0: i32) -> (i32, i32) {
    %c0_i32 = arith.constant 0 : i32
    %c0_i32_0 = arith.constant 0 : i32
    return %arg0, %c0_i32 : i32, i32
  }
  func.func @transform_1(%arg0: i32) -> (i32, i32) {
    %c0_i32 = arith.constant 0 : i32
    %c0_i32_0 = arith.constant 0 : i32
    return %arg0, %c0_i32 : i32, i32
  }
}

</mosaic_0001>

<llo_original>
// kernel: segmenter_forward.1
$region0: #{segmenter_forward.1}
  #allocation0 [shape = 'u32[]', space=smem, size = 0x4, offset = 0x4, fixed_abs, tag = 'smem constant byte address 0x4 - core index']
  #allocation1 [shape = 'u32[144,128]{1,0:T(1,128)}', space=vmem, size = 0x12000, scoped, tag = 'internal scratch']
  %s0 = inlined_call_operand.vmem [shape: f32[12,128], index: 0, kind: input, shape index: {}]
  %s1 = inlined_call_operand.vmem [shape: f32[12,128], index: 1, kind: output, shape index: {}]
  %s2 = sld [smem:[#allocation0]]
  $region14: #{segmenter_forward.1} parent=0
    _
  %s4 = ssub.s32 1, %s2
  %s5 = scalar_select 0, %s4, %s2
  // Predicated region
  $region2: #{segmenter_forward.1} parent=0 // pred_check
    _
  $region3: #{segmenter_forward.1} parent=0 // pred_check_branch
    %7 = sbr.rel (0) target = $region5
  $region4: #{segmenter_forward.1} parent=0 // pred_region
    _
  $region5: #{segmenter_forward.1} parent=0 // pred_fallthru
    _
  %v8 = vld [vmem:[%s0] sm:$0xff]
  %v9 = vld [vmem:[%s0 + $0x8] sm:$0xf]
  %10 = vst [vmem:[%s1] sm:$0xff] %v8
  %11 = vst [vmem:[%s1 + $0x8] sm:$0xf] %v9
  // Predicated region
  $region6: #{segmenter_forward.1} parent=0 // pred_check
    _
  $region7: #{segmenter_forward.1} parent=0 // pred_check_branch
    %13 = sbr.rel (0) target = $region9
  $region8: #{segmenter_forward.1} parent=0 // pred_region
    _
  $region9: #{segmenter_forward.1} parent=0 // pred_fallthru
    _
  // Predicated region
  $region10: #{segmenter_forward.1} parent=0 // pred_check
    _
  $region11: #{segmenter_forward.1} parent=0 // pred_check_branch
    %15 = sbr.rel (0) target = $region13
  $region12: #{segmenter_forward.1} parent=0 // pred_region
    _
  $region13: #{segmenter_forward.1} parent=0 // pred_fallthru
    _

</llo_original>
